<compile_context>
chip_gen: v5e
topology: v5e:2x2
jax: 0.10.0
libtpu: 0.0.40
codegen_flags: <defaults>
</compile_context>

<pallas_src>
import functools

import jax
import jax.numpy as jnp
from jax.experimental import pallas as pl
from jax.experimental.pallas import tpu as pltpu


def _round_up(x, m):
    return (x + m - 1) // m * m


def _vmem_capacity_bytes():
    try:
        return int(pltpu.get_tpu_info().vmem_capacity_bytes)
    except Exception:
        return 64 * 1024 * 1024   # conservative default: v7x per-TensorCore VMEM


def _pick_tile(batch, max_rows):
    """Batch-tile rows (multiple of 8, <=512, VMEM-capped) + compute chunk."""
    tb = min(512, _round_up(max(batch, 1), 8), max(8, (max_rows // 8) * 8))
    if tb >= 128:
        tb = (tb // 128) * 128
        chunk = 128
    else:
        chunk = tb
    return tb, chunk


# --------------------------------------------------------------------------
# Path A: both tables VMEM-resident, rows gathered on-chip (no DMA gather).
# --------------------------------------------------------------------------
def _resident_kernel(h_idx, r_idx, t_idx,        # SMEM (scalar prefetch), (padded_b,)
                     ent_ref, rel_ref,           # VMEM-resident tables
                     o_ref,                      # (tb, 1) output tile
                     h_buf, r_buf, t_buf,        # (tb, H) VMEM gather scratch
                     *, tile_b, chunk):
    base = pl.program_id(0) * tile_b

    # On-chip gather: dynamic row loads from the VMEM-resident tables.
    @pl.loop(0, tile_b)
    def _gather(j):
        h_buf[pl.ds(j, 1), :] = ent_ref[pl.ds(h_idx[base + j], 1), :]
        r_buf[pl.ds(j, 1), :] = rel_ref[pl.ds(r_idx[base + j], 1), :]
        t_buf[pl.ds(j, 1), :] = ent_ref[pl.ds(t_idx[base + j], 1), :]

    # Strip-mined L2 score: keeps live vregs small (no spills at large tiles).
    @pl.loop(0, tile_b // chunk)
    def _score(c):
        s = pl.multiple_of(c * chunk, chunk)
        d = (h_buf[pl.ds(s, chunk), :].astype(jnp.float32)
             + r_buf[pl.ds(s, chunk), :].astype(jnp.float32)
             - t_buf[pl.ds(s, chunk), :].astype(jnp.float32))
        o_ref[pl.ds(s, chunk), :] = jnp.sqrt(
            jnp.sum(d * d, axis=-1, keepdims=True))


# --------------------------------------------------------------------------
# Path B: entity rows DMA-gathered from HBM (double-buffered, one aggregated
#         wait per tile), relation table VMEM-resident (on-chip gather).
# --------------------------------------------------------------------------
def _dma_gather_kernel(h_idx, r_idx, t_idx,      # SMEM (scalar prefetch), (padded_b,)
                       ent_hbm, rel_ref,         # HBM entity table, VMEM relation table
                       o_ref,                    # (tb, 1) output tile
                       et_buf,                   # (2, 2*tb, H): rows [0,tb)=h, [tb,2tb)=t
                       r_buf,                    # (tb, H) on-chip-gathered relation rows
                       sem,                      # DMA semaphores, one per slot
                       *, tile_b, chunk):
    i = pl.program_id(0)
    n = pl.num_programs(0)
    tb = tile_b

    def issue(tile, slot):
        base = tile * tb
        @pl.loop(0, tb)
        def _issue(j):
            pltpu.make_async_copy(
                ent_hbm.at[pl.ds(h_idx[base + j], 1), :],
                et_buf.at[slot, pl.ds(j, 1), :], sem.at[slot]).start()
            pltpu.make_async_copy(
                ent_hbm.at[pl.ds(t_idx[base + j], 1), :],
                et_buf.at[slot, pl.ds(tb + j, 1), :], sem.at[slot]).start()

    @pl.when(i == 0)
    def _prime():
        issue(0, 0)

    slot = i % 2

    # Prefetch the NEXT tile's entity rows into the other slot before waiting
    # on this one (indices are already resident in SMEM).
    @pl.when(i + 1 < n)
    def _prefetch():
        issue(i + 1, 1 - slot)

    # Relation rows: tiny table is VMEM-resident -> gather on-chip (no DMA
    # descriptors); overlaps with the in-flight entity-row DMAs.
    @pl.loop(0, tb)
    def _gather_rel(j):
        r_buf[pl.ds(j, 1), :] = rel_ref[pl.ds(r_idx[i * tb + j], 1), :]

    # ONE aggregated wait per tile: the DMA semaphore counts bytes, so a single
    # (2*tb, H)-sized wait covers all 2*tb row copies issued into this slot.
    # (Descriptor is never started; only its byte count / semaphore are used.)
    pltpu.make_async_copy(et_buf.at[slot], et_buf.at[slot], sem.at[slot]).wait()

    @pl.loop(0, tb // chunk)
    def _score(c):
        s = pl.multiple_of(c * chunk, chunk)
        d = (et_buf[slot, pl.ds(s, chunk), :].astype(jnp.float32)
             + r_buf[pl.ds(s, chunk), :].astype(jnp.float32)
             - et_buf[slot, pl.ds(tb + s, chunk), :].astype(jnp.float32))
        o_ref[pl.ds(s, chunk), :] = jnp.sqrt(
            jnp.sum(d * d, axis=-1, keepdims=True))


# --------------------------------------------------------------------------
# Path C: both tables too large for VMEM -> pre-gathered rows, blocked scoring.
# --------------------------------------------------------------------------
def _pregathered_kernel(eh_ref, er_ref, et_ref, o_ref, *, tile_b, chunk):
    @pl.loop(0, tile_b // chunk)
    def _score(c):
        s = pl.multiple_of(c * chunk, chunk)
        d = (eh_ref[pl.ds(s, chunk), :].astype(jnp.float32)
             + er_ref[pl.ds(s, chunk), :].astype(jnp.float32)
             - et_ref[pl.ds(s, chunk), :].astype(jnp.float32))
        o_ref[pl.ds(s, chunk), :] = jnp.sqrt(
            jnp.sum(d * d, axis=-1, keepdims=True))


@jax.jit
def pairwise_forward(h, r, t, ent_emb, rel_emb):
    """Fused gather + TransE L2 score: ||E_ent[h] + E_rel[r] - E_ent[t]||_2.

    h, r, t: [B] int32 indices.   ent_emb: [E, H], rel_emb: [R, H].
    Returns: [B] float32 scores.
    """
    B = h.shape[0]
    E, H = ent_emb.shape
    R = rel_emb.shape[0]
    itemsize = jnp.dtype(ent_emb.dtype).itemsize

    cap = _vmem_capacity_bytes()          # chip-aware: 64 MiB/TC v7x, 128 MiB v5e/v6e
    budget = cap // 2                     # leave half of VMEM as headroom

    ent_bytes = E * H * itemsize
    rel_bytes = R * H * itemsize
    resident_overhead = 2 * (ent_bytes + rel_bytes)   # double-buffered inputs

    if resident_overhead <= budget:
        path = "resident"
        max_rows = (budget - resident_overhead) // max(1, 3 * H * itemsize)
        tb, chunk = _pick_tile(B, max_rows)
        vmem_need = resident_overhead + 3 * tb * H * itemsize + 2 * tb * 4
    elif 2 * rel_bytes <= budget // 2:
        path = "dma"
        max_rows = (budget - 2 * rel_bytes) // max(1, 5 * H * itemsize)
        tb, chunk = _pick_tile(B, max_rows)
        vmem_need = 2 * rel_bytes + 5 * tb * H * itemsize + 2 * tb * 4
    else:
        path = "pregather"
        max_rows = budget // max(1, 6 * H * itemsize)
        tb, chunk = _pick_tile(B, max_rows)
        vmem_need = 6 * tb * H * itemsize + 2 * tb * 4

    padded_b = _round_up(B, tb)
    num_tiles = padded_b // tb

    def prep_idx(idx):
        idx = jnp.asarray(idx, jnp.int32)
        return jnp.pad(idx, (0, padded_b - B))        # pad with index 0 (valid row)

    h1, r1, t1 = prep_idx(h), prep_idx(r), prep_idx(t)

    vmem_limit = int(min(max(8 * 1024 * 1024, cap - 2 * 1024 * 1024),
                         max(8 * 1024 * 1024, 2 * vmem_need)))
    out_shape = jax.ShapeDtypeStruct((padded_b, 1), jnp.float32)

    if path == "resident":
        cost = pl.CostEstimate(
            flops=4 * padded_b * H, transcendentals=padded_b,
            bytes_accessed=ent_bytes + rel_bytes + 4 * padded_b * 4)
        grid_spec = pltpu.PrefetchScalarGridSpec(
            num_scalar_prefetch=3,
            grid=(num_tiles,),
            in_specs=[pl.BlockSpec((E, H), lambda i, *_: (0, 0)),   # ent: VMEM-resident
                      pl.BlockSpec((R, H), lambda i, *_: (0, 0))],  # rel: VMEM-resident
            out_specs=pl.BlockSpec((tb, 1), lambda i, *_: (i, 0)),
            scratch_shapes=[pltpu.VMEM((tb, H), ent_emb.dtype),
                            pltpu.VMEM((tb, H), rel_emb.dtype),
                            pltpu.VMEM((tb, H), ent_emb.dtype)])
        scores = pl.pallas_call(
            functools.partial(_resident_kernel, tile_b=tb, chunk=chunk),
            out_shape=out_shape,
            grid_spec=grid_spec,
            compiler_params=pltpu.CompilerParams(
                dimension_semantics=("parallel",),    # v7x: tiles across both TCs
                vmem_limit_bytes=vmem_limit),
            cost_estimate=cost,
        )(h1, r1, t1, ent_emb, rel_emb)

    elif path == "dma":
        cost = pl.CostEstimate(
            flops=4 * padded_b * H, transcendentals=padded_b,
            bytes_accessed=2 * padded_b * H * itemsize + rel_bytes + 4 * padded_b * 4)
        grid_spec = pltpu.PrefetchScalarGridSpec(
            num_scalar_prefetch=3,
            grid=(num_tiles,),
            in_specs=[pl.BlockSpec(memory_space=pl.ANY),            # ent stays in HBM
                      pl.BlockSpec((R, H), lambda i, *_: (0, 0))],  # rel: VMEM-resident
            out_specs=pl.BlockSpec((tb, 1), lambda i, *_: (i, 0)),
            scratch_shapes=[pltpu.VMEM((2, 2 * tb, H), ent_emb.dtype),
                            pltpu.VMEM((tb, H), rel_emb.dtype),
                            pltpu.SemaphoreType.DMA((2,))])
        scores = pl.pallas_call(
            functools.partial(_dma_gather_kernel, tile_b=tb, chunk=chunk),
            out_shape=out_shape,
            grid_spec=grid_spec,
            compiler_params=pltpu.CompilerParams(
                # Cross-step prefetch carries state across tiles -> sequential.
                dimension_semantics=("arbitrary",),
                vmem_limit_bytes=vmem_limit),
            cost_estimate=cost,
        )(h1, r1, t1, ent_emb, rel_emb)

    else:  # "pregather" fallback (both tables larger than VMEM budget)
        e_h = jnp.take(ent_emb, h1, axis=0)
        e_r = jnp.take(rel_emb, r1, axis=0)
        e_t = jnp.take(ent_emb, t1, axis=0)
        scores = pl.pallas_call(
            functools.partial(_pregathered_kernel, tile_b=tb, chunk=chunk),
            out_shape=out_shape,
            grid=(num_tiles,),
            in_specs=[pl.BlockSpec((tb, H), lambda i: (i, 0))] * 3,
            out_specs=pl.BlockSpec((tb, 1), lambda i: (i, 0)),
            compiler_params=pltpu.CompilerParams(
                dimension_semantics=("parallel",),
                vmem_limit_bytes=vmem_limit),
        )(e_h, e_r, e_t)

    return scores[:B, 0]


class PairwiseModelPallas:
    """Concrete pairwise KGE model (TransE-style) with a fused Pallas kernel."""

    def __init__(self, model_name, num_entities, num_relations, hidden, key):
        self.model_name = model_name
        self.training_strategy = "PAIRWISE_BASED"   # TODO(synk): enum in pykg2vec
        self.database = {}
        k_ent, k_rel = jax.random.split(key)
        # Deterministic synthetic parameters (no checkpoint loading).
        self.ent_embeddings = jax.random.normal(
            k_ent, (num_entities, hidden), dtype=jnp.float32) * 0.1
        self.rel_embeddings = jax.random.normal(
            k_rel, (num_relations, hidden), dtype=jnp.float32) * 0.1

    def embed(self, h, r, t):
        # Plain-JAX gather, used only for the reference check.
        e_h = jnp.take(self.ent_embeddings, h, axis=0)
        e_r = jnp.take(self.rel_embeddings, r, axis=0)
        e_t = jnp.take(self.ent_embeddings, t, axis=0)
        return e_h, e_r, e_t

    def forward(self, h, r, t):
        # Gather is fused into the Pallas kernel (no e_h/e_r/e_t HBM round-trip).
        return pairwise_forward(h, r, t, self.ent_embeddings, self.rel_embeddings)

    def load_params(self, param_list, kwargs):
        for param_name in param_list:
            if param_name not in kwargs:
                raise Exception('hyperparameter %s not found!' % param_name)
            self.database[param_name] = kwargs[param_name]
        return self.database


if __name__ == "__main__":
    key = jax.random.PRNGKey(0)
    k_model, k_h, k_r, k_t = jax.random.split(key, 4)

    num_entities, num_relations, hidden = 64, 16, 128
    batch = 12   # deliberately not a multiple of the tile to exercise padding

    model = PairwiseModelPallas("TransE", num_entities, num_relations, hidden,
                                k_model)

    h = jax.random.randint(k_h, (batch,), 0, num_entities, dtype=jnp.int32)
    r = jax.random.randint(k_r, (batch,), 0, num_relations, dtype=jnp.int32)
    t = jax.random.randint(k_t, (batch,), 0, num_entities, dtype=jnp.int32)

    scores = model.forward(h, r, t)
    jax.block_until_ready(scores)

    # Reference check in plain JAX.
    e_h, e_r, e_t = model.embed(h, r, t)
    ref = jnp.sqrt(jnp.sum((e_h + e_r - e_t) ** 2, axis=-1))
    assert scores.shape == (batch,)
    assert jnp.allclose(scores, ref, atol=1e-5, rtol=1e-5)

    print("KERNEL_OK")
</pallas_src>

<mosaic_0001>
module attributes {stable_mosaic.version = 11 : i64} {
  func.func @_resident_kernel(%arg0: i32, %arg1: memref<16xi32, #tpu.memory_space<smem>>, %arg2: memref<16xi32, #tpu.memory_space<smem>>, %arg3: memref<16xi32, #tpu.memory_space<smem>>, %arg4: memref<64x128xf32, #tpu.memory_space<vmem>>, %arg5: memref<16x128xf32, #tpu.memory_space<vmem>>, %arg6: memref<16x1xf32, #tpu.memory_space<vmem>>, %arg7: memref<16x128xf32, #tpu.memory_space<vmem>>, %arg8: memref<16x128xf32, #tpu.memory_space<vmem>>, %arg9: memref<16x128xf32, #tpu.memory_space<vmem>>) attributes {dimension_semantics = [#tpu.dimension_semantics<parallel>], iteration_bounds = array<i64: 1>, scalar_prefetch = 3 : i64, scratch_operands = 3 : i64, tpu.core_type = #tpu.core_type<tc>, window_params = [{pipeline_mode = #tpu.pipeline_mode<synchronous>, transform_indices = @transform_0, window_bounds = array<i64: 64, 128>}, {pipeline_mode = #tpu.pipeline_mode<synchronous>, transform_indices = @transform_1, window_bounds = array<i64: 16, 128>}, {transform_indices = @transform_2, window_bounds = array<i64: 16, 1>}]} {
    %c16_i32 = arith.constant 16 : i32
    %0 = arith.muli %arg0, %c16_i32 : i32
    %c0_i32 = arith.constant 0 : i32
    %c16_i32_0 = arith.constant 16 : i32
    %1 = arith.addi %c0_i32, %c16_i32_0 : i32
    %c1_i32 = arith.constant 1 : i32
    scf.for %arg10 = %c0_i32 to %1 step %c1_i32  : i32 {
      %c1_i32_10 = arith.constant 1 : i32
      %20 = arith.muli %arg10, %c1_i32_10 : i32
      %c0_i32_11 = arith.constant 0 : i32
      %21 = arith.addi %c0_i32_11, %20 : i32
      %22 = arith.addi %0, %21 : i32
      %23 = arith.index_cast %22 : i32 to index
      %24 = memref.load %arg1[%23] : memref<16xi32, #tpu.memory_space<smem>>
      %25 = arith.index_cast %24 : i32 to index
      %c0_12 = arith.constant 0 : index
      %26 = vector.load %arg4[%25, %c0_12] : memref<64x128xf32, #tpu.memory_space<vmem>>, vector<1x128xf32>
      %27 = arith.index_cast %21 : i32 to index
      %c0_13 = arith.constant 0 : index
      %28 = vector.load %arg7[%27, %c0_13] : memref<16x128xf32, #tpu.memory_space<vmem>>, vector<1x128xf32>
      tpu.vector_store %arg7[%27, %c0_13], %26 {strides = array<i32>} : memref<16x128xf32, #tpu.memory_space<vmem>>, vector<1x128xf32>,
      %29 = arith.addi %0, %21 : i32
      %30 = arith.index_cast %29 : i32 to index
      %31 = memref.load %arg2[%30] : memref<16xi32, #tpu.memory_space<smem>>
      %32 = arith.index_cast %31 : i32 to index
      %c0_14 = arith.constant 0 : index
      %33 = vector.load %arg5[%32, %c0_14] : memref<16x128xf32, #tpu.memory_space<vmem>>, vector<1x128xf32>
      %34 = arith.index_cast %21 : i32 to index
      %c0_15 = arith.constant 0 : index
      %35 = vector.load %arg8[%34, %c0_15] : memref<16x128xf32, #tpu.memory_space<vmem>>, vector<1x128xf32>
      tpu.vector_store %arg8[%34, %c0_15], %33 {strides = array<i32>} : memref<16x128xf32, #tpu.memory_space<vmem>>, vector<1x128xf32>,
      %36 = arith.addi %0, %21 : i32
      %37 = arith.index_cast %36 : i32 to index
      %38 = memref.load %arg3[%37] : memref<16xi32, #tpu.memory_space<smem>>
      %39 = arith.index_cast %38 : i32 to index
      %c0_16 = arith.constant 0 : index
      %40 = vector.load %arg4[%39, %c0_16] : memref<64x128xf32, #tpu.memory_space<vmem>>, vector<1x128xf32>
      %41 = arith.index_cast %21 : i32 to index
      %c0_17 = arith.constant 0 : index
      %42 = vector.load %arg9[%41, %c0_17] : memref<16x128xf32, #tpu.memory_space<vmem>>, vector<1x128xf32>
      tpu.vector_store %arg9[%41, %c0_17], %40 {strides = array<i32>} : memref<16x128xf32, #tpu.memory_space<vmem>>, vector<1x128xf32>,
    }
    %c16_i32_1 = arith.constant 16 : i32
    %c0_i32_2 = arith.constant 0 : i32
    %c1_i32_3 = arith.constant 1 : i32
    %2 = arith.muli %c0_i32_2, %c1_i32_3 : i32
    %c0_i32_4 = arith.constant 0 : i32
    %3 = arith.addi %c0_i32_4, %2 : i32
    %c16_i32_5 = arith.constant 16 : i32
    %4 = arith.muli %3, %c16_i32_5 : i32
    %5 = tpu.assume_multiple %4, 16 : i32
    %6 = arith.index_cast %5 : i32 to index
    %c0 = arith.constant 0 : index
    %7 = vector.load %arg7[%6, %c0] : memref<16x128xf32, #tpu.memory_space<vmem>>, vector<16x128xf32>
    %8 = arith.index_cast %5 : i32 to index
    %c0_6 = arith.constant 0 : index
    %9 = vector.load %arg8[%8, %c0_6] : memref<16x128xf32, #tpu.memory_space<vmem>>, vector<16x128xf32>
    %10 = arith.addf %7, %9 : vector<16x128xf32>
    %11 = arith.index_cast %5 : i32 to index
    %c0_7 = arith.constant 0 : index
    %12 = vector.load %arg9[%11, %c0_7] : memref<16x128xf32, #tpu.memory_space<vmem>>, vector<16x128xf32>
    %13 = arith.subf %10, %12 : vector<16x128xf32>
    %14 = arith.mulf %13, %13 : vector<16x128xf32>
    %cst = arith.constant dense<0.000000e+00> : vector<16xf32>
    %15 = vector.multi_reduction <add>, %14, %cst [1] : vector<16x128xf32> to vector<16xf32>
    %16 = vector.shape_cast %15 : vector<16xf32> to vector<16x1xf32>
    %17 = math.sqrt %16 : vector<16x1xf32>
    %18 = arith.index_cast %5 : i32 to index
    %c0_8 = arith.constant 0 : index
    %19 = vector.load %arg6[%18, %c0_8] : memref<16x1xf32, #tpu.memory_space<vmem>>, vector<16x1xf32>
    tpu.vector_store %arg6[%18, %c0_8], %17 {strides = array<i32>} : memref<16x1xf32, #tpu.memory_space<vmem>>, vector<16x1xf32>,
    %c1_i32_9 = arith.constant 1 : i32
    return
  }
  func.func @transform_0(%arg0: i32, %arg1: memref<16xi32, #tpu.memory_space<smem>>, %arg2: memref<16xi32, #tpu.memory_space<smem>>, %arg3: memref<16xi32, #tpu.memory_space<smem>>) -> (i32, i32) {
    %c0_i32 = arith.constant 0 : i32
    %c0_i32_0 = arith.constant 0 : i32
    %c0_i32_1 = arith.constant 0 : i32
    return %c0_i32, %c0_i32_0 : i32, i32
  }
  func.func @transform_1(%arg0: i32, %arg1: memref<16xi32, #tpu.memory_space<smem>>, %arg2: memref<16xi32, #tpu.memory_space<smem>>, %arg3: memref<16xi32, #tpu.memory_space<smem>>) -> (i32, i32) {
    %c0_i32 = arith.constant 0 : i32
    %c0_i32_0 = arith.constant 0 : i32
    %c0_i32_1 = arith.constant 0 : i32
    return %c0_i32, %c0_i32_0 : i32, i32
  }
  func.func @transform_2(%arg0: i32, %arg1: memref<16xi32, #tpu.memory_space<smem>>, %arg2: memref<16xi32, #tpu.memory_space<smem>>, %arg3: memref<16xi32, #tpu.memory_space<smem>>) -> (i32, i32) {
    %c0_i32 = arith.constant 0 : i32
    %c0_i32_0 = arith.constant 0 : i32
    return %arg0, %c0_i32 : i32, i32
  }
}

</mosaic_0001>

<llo_original>
// kernel: pairwise_forward.1
$region0: #{pairwise_forward.1}
  #allocation0 [shape = 'u32[]', space=smem, size = 0x4, offset = 0x4, fixed_abs, tag = 'smem constant byte address 0x4 - core index']
  #allocation1 [shape = 'u32[72,128]{1,0:T(1,128)}', space=vmem, size = 0x9000, scoped, tag = 'internal scratch']
  #allocation2 [shape = 'f32[16,128]{1,0:T(8,128)}', space=vmem, size = 0x2000, scoped, tag = 'scratch operand']
  #allocation3 [shape = 'f32[16,128]{1,0:T(8,128)}', space=vmem, size = 0x2000, scoped, tag = 'scratch operand']
  #allocation4 [shape = 'f32[16,128]{1,0:T(8,128)}', space=vmem, size = 0x2000, scoped, tag = 'scratch operand']
  #allocation5 [shape = 's32[1]{0}', space=sflag, size = 0x4, scoped, tag = 'scoped memory for pairwise_forward.1']
  #allocation6 [shape = 'u8[512]{0}', space=smem, size = 0x200, scoped, tag = 'prefetched SMEM operand 0']
  #allocation7 [shape = 'u8[512]{0}', space=smem, size = 0x200, scoped, tag = 'prefetched SMEM operand 1']
  #allocation8 [shape = 'u8[512]{0}', space=smem, size = 0x200, scoped, tag = 'prefetched SMEM operand 2']
  %s0 = inlined_call_operand.vmem [shape: s32[16], index: 0, kind: input, shape index: {}]
  %s1 = inlined_call_operand.vmem [shape: s32[16], index: 1, kind: input, shape index: {}]
  %s2 = inlined_call_operand.vmem [shape: s32[16], index: 2, kind: input, shape index: {}]
  %s3 = inlined_call_operand.hbm [shape: f32[64,128], index: 3, kind: input, shape index: {}]
  %s4 = inlined_call_operand.hbm [shape: f32[16,128], index: 4, kind: input, shape index: {}]
  %s5 = inlined_call_operand.vmem [shape: f32[16,1], index: 5, kind: output, shape index: {}]
  %s6 = sld [smem:[#allocation0]]
  $region33: #{pairwise_forward.1} parent=0
    _
  %s8 = ssub.s32 1, %s6
  %s9 = scalar_select 0, %s8, %s6
  %s11 = sshll.u32 %s0, 4
  %s12 = int_to_ptr.vmem [resolvable:$true] %s11
  %14 = dma.vmem_to_smem %s12, 16, [#allocation6], [#allocation5]
  %s16 = sshll.u32 %s1, 4
  %s17 = int_to_ptr.vmem [resolvable:$true] %s16
  %19 = dma.vmem_to_smem %s17, 16, [#allocation7], [#allocation5]
  %s21 = sshll.u32 %s2, 4
  %s22 = int_to_ptr.vmem [resolvable:$true] %s21
  %24 = dma.vmem_to_smem %s22, 16, [#allocation8], [#allocation5]
  %26 = dma.done [#allocation5], 48
  %27 = sfence
  $region1: #{pairwise_forward.1} parent=0
    #allocation9 [shape = 'u8[32768]{0}', space=vmem, size = 0x8000, scoped, tag = 'input window, operand 3, single buffered']
    #allocation10 [shape = 's32[1]{0}', space=sflag, size = 0x4, scoped, tag = 'scoped memory for pairwise_forward.1']
    #allocation11 [shape = 'u8[8192]{0}', space=vmem, size = 0x2000, scoped, tag = 'input window, operand 4, single buffered']
    #allocation12 [shape = 's32[1]{0}', space=sflag, size = 0x4, scoped, tag = 'scoped memory for pairwise_forward.1']
    %28 = vsyncpa [#allocation10], 0
    %29 = vsyncpa [#allocation12], 0
    // Predicated region
    $region2: #{pairwise_forward.1} parent=1 // pred_check
      _
    $region3: #{pairwise_forward.1} parent=1 // pred_check_branch
      %31 = sbr.rel (0) target = $region5
    $region4: #{pairwise_forward.1} parent=1 // pred_region
      %33 = vsyncadd [#allocation10], 0
      %s34 = sshll.u32 %s3, 4
      %s35 = int_to_ptr.hbm [resolvable:$true] %s34
      %s36 = sshll.u32 [#allocation9], 4
      %s37 = int_to_ptr.vmem [resolvable:$true] %s36
      %42 = dma.hbm_to_vmem [thread:$0]  %s35, 1024, %s37, [#allocation10], 128, 128, 8
    $region5: #{pairwise_forward.1} parent=1 // pred_fallthru
      _
    // Predicated region
    $region6: #{pairwise_forward.1} parent=1 // pred_check
      _
    $region7: #{pairwise_forward.1} parent=1 // pred_check_branch
      %44 = sbr.rel (0) target = $region9
    $region8: #{pairwise_forward.1} parent=1 // pred_region
      %46 = vsyncadd [#allocation12], 0
      %s47 = sshll.u32 %s4, 4
      %s48 = int_to_ptr.hbm [resolvable:$true] %s47
      %s49 = sshll.u32 [#allocation11], 4
      %s50 = int_to_ptr.vmem [resolvable:$true] %s49
      %55 = dma.hbm_to_vmem [thread:$0]  %s48, 256, %s50, [#allocation12], 128, 128, 8
    $region9: #{pairwise_forward.1} parent=1 // pred_fallthru
      _
    // Predicated region
    $region10: #{pairwise_forward.1} parent=1 // pred_check
      _
    $region11: #{pairwise_forward.1} parent=1 // pred_check_branch
      %57 = sbr.rel (0) target = $region13
    $region12: #{pairwise_forward.1} parent=1 // pred_region
      %59 = dma.done [#allocation10], 1024
    $region13: #{pairwise_forward.1} parent=1 // pred_fallthru
      _
    // Predicated region
    $region14: #{pairwise_forward.1} parent=1 // pred_check
      _
    $region15: #{pairwise_forward.1} parent=1 // pred_check_branch
      %61 = sbr.rel (0) target = $region17
    $region16: #{pairwise_forward.1} parent=1 // pred_region
      %63 = dma.done [#allocation12], 256
    $region17: #{pairwise_forward.1} parent=1 // pred_fallthru
      _
    %s64 = smul.u32 0, 16
    loop: start=0, step=1, limit=16
    $region18: #{pairwise_forward.1} parent=1 // loop_pre_header
      _
    $region19: #{pairwise_forward.1} parent=1 // loop_header
      %s66 = sphi 0, %s70
      %p67 = scmp.ge.s32.totalorder %s66, 16
    $region20: #{pairwise_forward.1} parent=1 // loop_header_branch
      %69 = sbr.rel (%p67) target = $region24
    $region21: #{pairwise_forward.1} parent=1 // loop_body
      %s71 = sadd.s32 %s64, %s66
      %s72 = sld [smem:[#allocation6 + %s71]]
      %s73 = scalar_lea.vmem [#allocation9], %s72
      %v74 = vld [vmem:[%s73] sm:$0x1]
      %s75 = scalar_lea.vmem [#allocation2], %s66
      %76 = vst [vmem:[%s75] sm:$0x1] %v74
      %s77 = sld [smem:[#allocation7 + %s71]]
      %s78 = scalar_lea.vmem [#allocation11], %s77
      %v79 = vld [vmem:[%s78] sm:$0x1]
      %s80 = scalar_lea.vmem [#allocation3], %s66
      %81 = vst [vmem:[%s80] sm:$0x1] %v79
      %s82 = sld [smem:[#allocation8 + %s71]]
      %s83 = scalar_lea.vmem [#allocation9], %s82
      %v84 = vld [vmem:[%s83] sm:$0x1]
      %s85 = scalar_lea.vmem [#allocation4], %s66
      %86 = vst [vmem:[%s85] sm:$0x1] %v84
    $region22: #{pairwise_forward.1} parent=1 // loop_footer
      %s70 = sadd.s32 1, %s66
    $region23: #{pairwise_forward.1} parent=1 // loop_footer_branch
      %65 = sbr.rel target = $region19
    $region24: #{pairwise_forward.1} parent=1 // loop_exit
      _
    %v87 = vld [vmem:[#allocation2] sm:$0xff]
    %v88 = vld [vmem:[#allocation2 + $0x8] sm:$0xff]
    %v89 = vld [vmem:[#allocation3] sm:$0xff]
    %v90 = vld [vmem:[#allocation3 + $0x8] sm:$0xff]
    %v91 = vadd.f32 %v87, %v89
    %v92 = vadd.f32 %v88, %v90
    %v93 = vld [vmem:[#allocation4] sm:$0xff]
    %v94 = vld [vmem:[#allocation4 + $0x8] sm:$0xff]
    %v95 = vsub.f32 %v91, %v93
    %v96 = vsub.f32 %v92, %v94
    %v97 = vmul.f32 %v95, %v95
    %v98 = vmul.f32 %v96, %v96
    %99 = vadd.xlane.f32.xlu0 %v97
    %v100 = vpop.xlane.xlu0 %99
    %101 = vadd.xlane.f32.xlu0 %v98
    %v102 = vpop.xlane.xlu0 %101
    %v103 = vrsqrt.pop %v100
    %v104 = vmul.f32 %v103, %v100
    %v105 = vmul.f32 %v104, %v103
    %v106 = vmul.f32 0.5, %v105
    %v107 = vsub.f32 1.5, %v106
    %v108 = vmul.f32 %v103, %v107
    %v109 = vmul.f32 %v100, %v108
    %vm110 = vcmp.eq.f32.partialorder %v100, inf
    %v111 = vsel %vm110, %v100, %v109
    %vm112 = vcmp.eq.f32.partialorder %v100, 0.0
    %v113 = vand.u32 %v100, 2147483648
    %v114 = vsel %vm112, %v113, %v111
    %v115 = vrsqrt.pop %v102
    %v116 = vmul.f32 %v115, %v102
    %v117 = vmul.f32 %v116, %v115
    %v118 = vmul.f32 0.5, %v117
    %v119 = vsub.f32 1.5, %v118
    %v120 = vmul.f32 %v115, %v119
    %v121 = vmul.f32 %v102, %v120
    %vm122 = vcmp.eq.f32.partialorder %v102, inf
    %v123 = vsel %vm122, %v102, %v121
    %vm124 = vcmp.eq.f32.partialorder %v102, 0.0
    %v125 = vand.u32 %v102, 2147483648
    %v126 = vsel %vm124, %v125, %v123
    %vm127 = vcmask 7168
    %128 = vst.msk [vmem:[%s5] sm:$0xff] %vm127, %v114
    %129 = vst.msk [vmem:[%s5 + $0x8] sm:$0xff] %vm127, %v126
    // Predicated region
    $region25: #{pairwise_forward.1} parent=1 // pred_check
      _
    $region26: #{pairwise_forward.1} parent=1 // pred_check_branch
      %131 = sbr.rel (0) target = $region28
    $region27: #{pairwise_forward.1} parent=1 // pred_region
      _
    $region28: #{pairwise_forward.1} parent=1 // pred_fallthru
      _
    // Predicated region
    $region29: #{pairwise_forward.1} parent=1 // pred_check
      _
    $region30: #{pairwise_forward.1} parent=1 // pred_check_branch
      %133 = sbr.rel (0) target = $region32
    $region31: #{pairwise_forward.1} parent=1 // pred_region
      _
    $region32: #{pairwise_forward.1} parent=1 // pred_fallthru
      _
    %134 = vsyncpa [#allocation10], 1
    %135 = vsyncpa [#allocation12], 1

</llo_original>
